<compile_context>
chip_gen: v6e
topology: v6e:2x2x1
jax: 0.10.0
libtpu: 0.0.40
codegen_flags: <defaults>
</compile_context>

<pallas_src>
import functools

import jax
import jax.numpy as jnp
from jax.experimental import pallas as pl
from jax.experimental.pallas import tpu as pltpu

EPS = 1e-8  # PyTorch F.cosine_similarity default eps

_STREAM_VMEM_BUDGET = 12 * 1024 * 1024  # double-buffered stream budget (safe v5e..v7x)
_EMBED_VMEM_BUDGET = 4 * 1024 * 1024    # resident-table budget for the fused gather
_MAX_TM = 2048


def _round_up(a, b):
    return (a + b - 1) // b * b


def _cossim_rows_kernel(x_ref, ids_ref, emb_ref, o_ref, *, ignore_index, fused):
    """Per tile of tm rows: write per-row masked (1 - cosine_similarity)."""
    x = x_ref[...].astype(jnp.float32)                # (tm, D)
    ids = ids_ref[...]                                # (tm, 1) int32
    valid = ids != ignore_index                       # (tm, 1) bool

    if fused:
        # Exact row gather from the VMEM-resident table via one-hot matmul (MXU).
        tm = x.shape[0]
        vocab = emb_ref.shape[0]
        onehot = (jax.lax.broadcasted_iota(jnp.int32, (tm, vocab), 1) == ids)
        e = jnp.dot(onehot.astype(jnp.float32),
                    emb_ref[...].astype(jnp.float32),
                    preferred_element_type=jnp.float32,
                    precision=jax.lax.Precision.HIGHEST)     # (tm, D)
    else:
        e = emb_ref[...].astype(jnp.float32)                 # (tm, D) pre-gathered

    dot = jnp.sum(x * e, axis=-1, keepdims=True)             # (tm, 1)
    nx2 = jnp.sum(x * x, axis=-1, keepdims=True)             # (tm, 1)
    ne2 = jnp.sum(e * e, axis=-1, keepdims=True)             # (tm, 1)
    # max(sqrt(s), eps) == sqrt(max(s, eps^2)) for s >= 0  -> rsqrt on the EUP slot.
    inv = jax.lax.rsqrt(jnp.maximum(nx2, EPS * EPS)) * jax.lax.rsqrt(
        jnp.maximum(ne2, EPS * EPS))
    cos = dot * inv
    # where (select), not multiply, so garbage in OOB/ignored rows can never leak.
    o_ref[...] = jnp.where(valid, 1.0 - cos, 0.0)            # (tm, 1)


@functools.partial(jax.jit, static_argnames=("ignore_index",))
def cossim_loss_sum_pallas(flat_logits, flat_tgts, embed, *, ignore_index):
    """Returns sum over rows with tgt != ignore_index of (1 - cos(logit_i, embed[tgt_i]))."""
    M, D = flat_logits.shape
    V, De = embed.shape
    assert D == De
    ids = flat_tgts.astype(jnp.int32).reshape(M, 1)

    fused = V * D * embed.dtype.itemsize <= _EMBED_VMEM_BUDGET
    if fused:
        emb_in = embed
    else:
        # TODO(synk): for very large vocabularies the gather stays in XLA; an
        # in-kernel scalar-prefetch/DMA gather would remove this extra HBM pass.
        safe = jnp.where(flat_tgts.astype(jnp.int32) != ignore_index,
                         flat_tgts.astype(jnp.int32), 0)
        emb_in = jnp.take(embed, safe, axis=0)               # (M, D)

    # Row tile: largest multiple of 8 whose double-buffered streams fit the budget.
    row_bytes = D * flat_logits.dtype.itemsize + 4 + 4       # logits + ids + out
    if not fused:
        row_bytes += D * embed.dtype.itemsize                # + gathered embed stream
    tm = max(8, min(_MAX_TM, (_STREAM_VMEM_BUDGET // (2 * row_bytes)) // 8 * 8))
    tm = min(tm, _round_up(M, 8))
    grid = (pl.cdiv(M, tm),)

    if fused:
        emb_spec = pl.BlockSpec((V, D), lambda i: (0, 0))    # resident in VMEM
        gather_flops = 2 * M * V * D
        emb_bytes = V * D * embed.dtype.itemsize
    else:
        emb_spec = pl.BlockSpec((tm, D), lambda i: (i, 0))
        gather_flops = 0
        emb_bytes = M * D * embed.dtype.itemsize

    cost = pl.CostEstimate(
        flops=8 * M * D + gather_flops,
        transcendentals=2 * M,
        bytes_accessed=M * D * flat_logits.dtype.itemsize + 2 * M * 4 + emb_bytes,
    )

    kernel = functools.partial(_cossim_rows_kernel,
                               ignore_index=ignore_index, fused=fused)

    per_row = pl.pallas_call(
        kernel,
        out_shape=jax.ShapeDtypeStruct((M, 1), jnp.float32),
        grid_spec=pltpu.PrefetchScalarGridSpec(
            num_scalar_prefetch=0,
            grid=grid,
            in_specs=[
                pl.BlockSpec((tm, D), lambda i: (i, 0)),     # logit rows (native dtype)
                pl.BlockSpec((tm, 1), lambda i: (i, 0)),     # token ids (int32)
                emb_spec,                                    # embed table / gathered rows
            ],
            out_specs=pl.BlockSpec((tm, 1), lambda i: (i, 0)),
        ),
        compiler_params=pltpu.CompilerParams(
            dimension_semantics=("parallel",),
            vmem_limit_bytes=32 * 1024 * 1024,
        ),
        cost_estimate=cost,
    )(flat_logits, ids, emb_in)

    return jnp.sum(per_row)


def cossim_loss_forward(outputs, targets, embed, ignore_index):
    """Mirrors CosSimLoss.forward.

    outputs: [B_all, N, D] float array
    targets: list of dicts; entries with 'answer' key hold 'answer_token_ids' [N] int
    embed:   [V, D] float array
    """
    # --- filter (host-side glue, matches CosSimLoss.filter) ---
    idx_filtered = [(i, t) for i, t in enumerate(targets) if "answer" in t]
    idxs, filtered_targets = zip(*idx_filtered)
    filtered_logits = outputs[jnp.array(list(idxs))]          # [B, N, D]
    B, N, D = filtered_logits.shape

    # --- flatten (glue); keep native dtype, no padding, no mask materialization ---
    flat_logits = filtered_logits.reshape(B * N, D)
    flat_tgts = jnp.stack([jnp.asarray(t["answer_token_ids"])
                           for t in filtered_targets]).reshape(-1)

    # --- hot path: Pallas kernel (in-kernel gather + mask + cos + per-row loss) ---
    loss_sum = cossim_loss_sum_pallas(flat_logits, flat_tgts, embed,
                                      ignore_index=ignore_index)
    return loss_sum / B


def _reference(outputs, targets, embed, ignore_index):
    idx_filtered = [(i, t) for i, t in enumerate(targets) if "answer" in t]
    idxs, filtered_targets = zip(*idx_filtered)
    fl = outputs[jnp.array(list(idxs))]
    B, N, D = fl.shape
    x = fl.reshape(B * N, D).astype(jnp.float32)
    tg = jnp.stack([t["answer_token_ids"] for t in filtered_targets]).reshape(-1)
    valid = tg != ignore_index
    e = jnp.take(embed, jnp.where(valid, tg, 0), axis=0).astype(jnp.float32)
    dot = jnp.sum(x * e, -1)
    nx = jnp.sqrt(jnp.sum(x * x, -1))
    ne = jnp.sqrt(jnp.sum(e * e, -1))
    cos = dot / (jnp.maximum(nx, EPS) * jnp.maximum(ne, EPS))
    return jnp.sum(jnp.where(valid, 1.0 - cos, 0.0)) / B


if __name__ == "__main__":
    key = jax.random.PRNGKey(0)
    B_all, N, D, V = 3, 8, 32, 64
    ignore_index = -100  # cfg.pad_idx

    k1, k2, k3 = jax.random.split(key, 3)
    outputs = jax.random.normal(k1, (B_all, N, D), dtype=jnp.float32)
    embed = jax.random.normal(k2, (V, D), dtype=jnp.float32)

    # Two of the three samples carry an 'answer' (exercises the filter path);
    # some token ids are the ignore_index (exercises the valid mask).
    tok = jax.random.randint(k3, (B_all, N), 0, V)
    tok = tok.at[0, -2:].set(ignore_index)
    tok = tok.at[2, -3:].set(ignore_index)
    targets = [
        {"answer": "yes", "answer_token_ids": tok[0]},
        {"no_answer_here": True},
        {"answer": "no", "answer_token_ids": tok[2]},
    ]

    loss = cossim_loss_forward(outputs, targets, embed, ignore_index)
    loss = jax.block_until_ready(loss)

    ref = _reference(outputs, targets, embed, ignore_index)
    assert jnp.allclose(loss, ref, rtol=1e-4, atol=1e-4), (loss, ref)
    print("KERNEL_OK")
</pallas_src>

<mosaic_0001>
module attributes {stable_mosaic.version = 11 : i64} {
  func.func @_cossim_rows_kernel(%arg0: i32, %arg1: memref<16x32xf32, #tpu.memory_space<vmem>>, %arg2: memref<16x1xi32, #tpu.memory_space<vmem>>, %arg3: memref<64x32xf32, #tpu.memory_space<vmem>>, %arg4: memref<16x1xf32, #tpu.memory_space<vmem>>) attributes {dimension_semantics = [#tpu.dimension_semantics<parallel>], iteration_bounds = array<i64: 1>, scalar_prefetch = 0 : i64, scratch_operands = 0 : i64, tpu.core_type = #tpu.core_type<tc>, window_params = [{transform_indices = @transform_0, window_bounds = array<i64: 16, 32>}, {transform_indices = @transform_1, window_bounds = array<i64: 16, 1>}, {pipeline_mode = #tpu.pipeline_mode<synchronous>, transform_indices = @transform_2, window_bounds = array<i64: 64, 32>}, {transform_indices = @transform_3, window_bounds = array<i64: 16, 1>}]} {
    %c0 = arith.constant 0 : index
    %c0_0 = arith.constant 0 : index
    %0 = vector.load %arg1[%c0, %c0_0] : memref<16x32xf32, #tpu.memory_space<vmem>>, vector<16x32xf32>
    %c0_1 = arith.constant 0 : index
    %c0_2 = arith.constant 0 : index
    %1 = vector.load %arg2[%c0_1, %c0_2] : memref<16x1xi32, #tpu.memory_space<vmem>>, vector<16x1xi32>
    %c-100_i32 = arith.constant -100 : i32
    %2 = vector.broadcast %c-100_i32 : i32 to vector<16x1xi32>
    %3 = arith.cmpi ne, %1, %2 : vector<16x1xi32>
    %4 = tpu.iota {dimensions = array<i32: 1>} : vector<16x64xi32>
    %5 = vector.broadcast %1 : vector<16x1xi32> to vector<16x64xi32>
    %6 = arith.cmpi eq, %4, %5 : vector<16x64xi32>
    %7 = arith.extui %6 : vector<16x64xi1> to vector<16x64xi32>
    %8 = arith.sitofp %7 : vector<16x64xi32> to vector<16x64xf32>
    %c0_3 = arith.constant 0 : index
    %c0_4 = arith.constant 0 : index
    %9 = vector.load %arg3[%c0_3, %c0_4] : memref<64x32xf32, #tpu.memory_space<vmem>>, vector<64x32xf32>
    %cst = arith.constant dense<0.000000e+00> : vector<16x32xf32>
    %10 = tpu.matmul %8, %9, %cst {dimension_numbers = #tpu.dot_dimension_numbers<[1], [0], [0], [1], [0, 0, 1, 1], [], []>, precision = #tpu.contract_precision<fp32>} : vector<16x64xf32>, vector<64x32xf32>, vector<16x32xf32> -> vector<16x32xf32>
    %11 = arith.mulf %0, %10 : vector<16x32xf32>
    %cst_5 = arith.constant dense<0.000000e+00> : vector<16xf32>
    %12 = vector.multi_reduction <add>, %11, %cst_5 [1] : vector<16x32xf32> to vector<16xf32>
    %13 = vector.shape_cast %12 : vector<16xf32> to vector<16x1xf32>
    %14 = arith.mulf %0, %0 : vector<16x32xf32>
    %cst_6 = arith.constant dense<0.000000e+00> : vector<16xf32>
    %15 = vector.multi_reduction <add>, %14, %cst_6 [1] : vector<16x32xf32> to vector<16xf32>
    %16 = vector.shape_cast %15 : vector<16xf32> to vector<16x1xf32>
    %17 = arith.mulf %10, %10 : vector<16x32xf32>
    %cst_7 = arith.constant dense<0.000000e+00> : vector<16xf32>
    %18 = vector.multi_reduction <add>, %17, %cst_7 [1] : vector<16x32xf32> to vector<16xf32>
    %19 = vector.shape_cast %18 : vector<16xf32> to vector<16x1xf32>
    %cst_8 = arith.constant 1.000000e-16 : f32
    %20 = vector.broadcast %cst_8 : f32 to vector<16x1xf32>
    %21 = arith.maximumf %16, %20 : vector<16x1xf32>
    %22 = math.rsqrt %21 : vector<16x1xf32>
    %cst_9 = arith.constant 1.000000e-16 : f32
    %23 = vector.broadcast %cst_9 : f32 to vector<16x1xf32>
    %24 = arith.maximumf %19, %23 : vector<16x1xf32>
    %25 = math.rsqrt %24 : vector<16x1xf32>
    %26 = arith.mulf %22, %25 : vector<16x1xf32>
    %27 = arith.mulf %13, %26 : vector<16x1xf32>
    %cst_10 = arith.constant 1.000000e+00 : f32
    %28 = vector.broadcast %cst_10 : f32 to vector<16x1xf32>
    %29 = arith.subf %28, %27 : vector<16x1xf32>
    %cst_11 = arith.constant 0.000000e+00 : f32
    %30 = vector.broadcast %cst_11 : f32 to vector<16x1xf32>
    %31 = arith.select %3, %29, %30 : vector<16x1xi1>, vector<16x1xf32>
    %c0_12 = arith.constant 0 : index
    %c0_13 = arith.constant 0 : index
    %32 = vector.load %arg4[%c0_12, %c0_13] : memref<16x1xf32, #tpu.memory_space<vmem>>, vector<16x1xf32>
    tpu.vector_store %arg4[%c0_12, %c0_13], %31 {strides = array<i32>} : memref<16x1xf32, #tpu.memory_space<vmem>>, vector<16x1xf32>,
    return
  }
  func.func @transform_0(%arg0: i32) -> (i32, i32) {
    %c0_i32 = arith.constant 0 : i32
    %c0_i32_0 = arith.constant 0 : i32
    return %arg0, %c0_i32 : i32, i32
  }
  func.func @transform_1(%arg0: i32) -> (i32, i32) {
    %c0_i32 = arith.constant 0 : i32
    %c0_i32_0 = arith.constant 0 : i32
    return %arg0, %c0_i32 : i32, i32
  }
  func.func @transform_2(%arg0: i32) -> (i32, i32) {
    %c0_i32 = arith.constant 0 : i32
    %c0_i32_0 = arith.constant 0 : i32
    %c0_i32_1 = arith.constant 0 : i32
    return %c0_i32, %c0_i32_0 : i32, i32
  }
  func.func @transform_3(%arg0: i32) -> (i32, i32) {
    %c0_i32 = arith.constant 0 : i32
    %c0_i32_0 = arith.constant 0 : i32
    return %arg0, %c0_i32 : i32, i32
  }
}

</mosaic_0001>

<llo_original>
// kernel: cossim_loss_sum_pallas.1
$region0: #{cossim_loss_sum_pallas.1}
  #allocation0 [shape = 'u32[]', space=smem, size = 0x4, offset = 0x4, fixed_abs, tag = 'smem constant byte address 0x4 - core index']
  #allocation1 [shape = 'u32[144,128]{1,0:T(1,128)}', space=vmem, size = 0x12000, scoped, tag = 'internal scratch']
  %s0 = inlined_call_operand.vmem [shape: f32[16,32], index: 0, kind: input, shape index: {}]
  %s1 = inlined_call_operand.vmem [shape: s32[16,1], index: 1, kind: input, shape index: {}]
  %s2 = inlined_call_operand.vmem [shape: f32[64,32], index: 2, kind: input, shape index: {}]
  %s3 = inlined_call_operand.vmem [shape: f32[16,1], index: 3, kind: output, shape index: {}]
  %s4 = sld [smem:[#allocation0]]
  $region22: #{cossim_loss_sum_pallas.1} parent=0
    _
  %s6 = ssub.s32 1, %s4
  %s7 = scalar_select 0, %s6, %s4
  // Predicated region
  $region2: #{cossim_loss_sum_pallas.1} parent=0 // pred_check
    _
  $region3: #{cossim_loss_sum_pallas.1} parent=0 // pred_check_branch
    %9 = sbr.rel (0) target = $region5
  $region4: #{cossim_loss_sum_pallas.1} parent=0 // pred_region
    _
  $region5: #{cossim_loss_sum_pallas.1} parent=0 // pred_fallthru
    _
  // Predicated region
  $region6: #{cossim_loss_sum_pallas.1} parent=0 // pred_check
    _
  $region7: #{cossim_loss_sum_pallas.1} parent=0 // pred_check_branch
    %11 = sbr.rel (0) target = $region9
  $region8: #{cossim_loss_sum_pallas.1} parent=0 // pred_region
    _
  $region9: #{cossim_loss_sum_pallas.1} parent=0 // pred_fallthru
    _
  // Predicated region
  $region10: #{cossim_loss_sum_pallas.1} parent=0 // pred_check
    _
  $region11: #{cossim_loss_sum_pallas.1} parent=0 // pred_check_branch
    %13 = sbr.rel (0) target = $region13
  $region12: #{cossim_loss_sum_pallas.1} parent=0 // pred_region
    _
  $region13: #{cossim_loss_sum_pallas.1} parent=0 // pred_fallthru
    _
  %v14 = vld [vmem:[%s0] sm:$0xff]
  %v15 = vld [vmem:[%s0 + $0x8] sm:$0xff]
  %v16 = vld [vmem:[%s1] sm:$0xff]
  %v17 = vld [vmem:[%s1 + $0x8] sm:$0xff]
  %vm18 = vcmp.ne.s32.totalorder %v16, 4294967196
  %vm19 = vcmp.ne.s32.totalorder %v17, 4294967196
  %v20 = vlaneseq
  %v21 = vand.u32 %v20, 127
  %22 = vset.pattern.permute.xlu0 0
  %23 = vperm.xlu0 %22, %v16
  %v24 = vpop.permute.xlu0 %23
  %25 = vset.pattern.permute.xlu0 0
  %26 = vperm.xlu0 %25, %v17
  %v27 = vpop.permute.xlu0 %26
  %vm28 = vcmp.eq.s32.totalorder %v21, %v24
  %vm29 = vcmp.eq.s32.totalorder %v21, %v27
  %v30 = vsel %vm28, 1, 0
  %v31 = vsel %vm29, 1, 0
  %v32 = vcvt.s32.f32 %v30
  %v33 = vcvt.s32.f32 %v31
  %v34 = vld [vmem:[%s2] sm:$0xff]
  %v35 = vld [vmem:[%s2 + $0x8] sm:$0xff]
  %v36 = vld [vmem:[%s2 + $0x10] sm:$0xff]
  %v37 = vld [vmem:[%s2 + $0x18] sm:$0xff]
  %v38 = vld [vmem:[%s2 + $0x20] sm:$0xff]
  %v39 = vld [vmem:[%s2 + $0x28] sm:$0xff]
  %v40 = vld [vmem:[%s2 + $0x30] sm:$0xff]
  %v41 = vld [vmem:[%s2 + $0x38] sm:$0xff]
  %vm42 = vcmask 523264
  %v44 = vsel %vm42, %v32, 0
  %v47 = vsel %vm42, %v33, 0
  %49 = vmatprep.subr.mxu0 0.0
  %50 = vmatpush1.msra.mxu0 0.0
  %51 = vmatprep.subr.mxu0 0.0
  %52 = vmatpush1.msra.mxu0 0.0
  %53 = vmatprep.subr.mxu0 0.0
  %54 = vmatpush1.msra.mxu0 0.0
  %55 = vmatprep.subr.mxu0 0.0
  %56 = vmatpush1.msra.mxu0 0.0
  %57 = vmatprep.subr.mxu0 0.0
  %58 = vmatpush1.msra.mxu0 0.0
  %59 = vmatprep.subr.mxu0 0.0
  %60 = vmatpush1.msra.mxu0 0.0
  %61 = vmatprep.subr.mxu0 0.0
  %62 = vmatpush1.msra.mxu0 0.0
  %63 = vmatprep.subr.mxu0 0.0
  %64 = vmatpush1.msra.mxu0 0.0
  %65 = vmatprep.subr.mxu0 0.0
  %v66 = vand.u32 %v41, 4294901760
  %67 = vmatpush1.msra.mxu0 %v66
  %68 = vmatprep.subr.mxu0 0.0
  %v69 = vand.u32 %v40, 4294901760
  %70 = vmatpush1.msra.mxu0 %v69
  %71 = vmatprep.subr.mxu0 0.0
  %v72 = vand.u32 %v39, 4294901760
  %73 = vmatpush1.msra.mxu0 %v72
  %74 = vmatprep.subr.mxu0 0.0
  %v75 = vand.u32 %v38, 4294901760
  %76 = vmatpush1.msra.mxu0 %v75
  %77 = vmatprep.subr.mxu0 0.0
  %v78 = vand.u32 %v37, 4294901760
  %79 = vmatpush1.msra.mxu0 %v78
  %80 = vmatprep.subr.mxu0 0.0
  %v81 = vand.u32 %v36, 4294901760
  %82 = vmatpush1.msra.mxu0 %v81
  %83 = vmatprep.subr.mxu0 0.0
  %v84 = vand.u32 %v35, 4294901760
  %85 = vmatpush1.msra.mxu0 %v84
  %86 = vmatprep.subr.mxu0 0.0
  %v87 = vand.u32 %v34, 4294901760
  %88 = vmatpush1.msra.mxu0 %v87
  %89 = vmatprep.subr.mxu0 0.0
  %90 = vmatpush2.msra.mxu0 0.0
  %91 = vmatprep.subr.mxu0 0.0
  %92 = vmatpush2.msra.mxu0 0.0
  %93 = vmatprep.subr.mxu0 0.0
  %94 = vmatpush2.msra.mxu0 0.0
  %95 = vmatprep.subr.mxu0 0.0
  %96 = vmatpush2.msra.mxu0 0.0
  %97 = vmatprep.subr.mxu0 0.0
  %98 = vmatpush2.msra.mxu0 0.0
  %99 = vmatprep.subr.mxu0 0.0
  %100 = vmatpush2.msra.mxu0 0.0
  %101 = vmatprep.subr.mxu0 0.0
  %102 = vmatpush2.msra.mxu0 0.0
  %103 = vmatprep.subr.mxu0 0.0
  %104 = vmatpush2.msra.mxu0 0.0
  %105 = vmatprep.subr.mxu0 0.0
  %106 = vmatpush2.msra.mxu0 0.0
  %107 = vmatprep.subr.mxu0 0.0
  %108 = vmatpush2.msra.mxu0 0.0
  %109 = vmatprep.subr.mxu0 0.0
  %110 = vmatpush2.msra.mxu0 0.0
  %111 = vmatprep.subr.mxu0 0.0
  %112 = vmatpush2.msra.mxu0 0.0
  %113 = vmatprep.subr.mxu0 0.0
  %114 = vmatpush2.msra.mxu0 0.0
  %115 = vmatprep.subr.mxu0 0.0
  %116 = vmatpush2.msra.mxu0 0.0
  %117 = vmatprep.subr.mxu0 0.0
  %118 = vmatpush2.msra.mxu0 0.0
  %119 = vmatprep.subr.mxu0 0.0
  %120 = vmatpush2.msra.mxu0 0.0
  %121 = vmatprep.mubr.f32.mxu0 0.0
  %v122 = vand.u32 %v44, 4294901760
  %v123 = vsub.f32 %v44, %v122
  %v124 = vand.u32 %v123, 4294901760
  %v125 = vsub.f32 %v123, %v124
  %v126 = vand.u32 %v125, 4294901760
  %127 = vmatmul.mubr.f32.gmra.mxu0 %v126
  %v128 = vpop.f32.mrf.mxu0
  %v129 = vadd.f32 0.0, %v128
  %v130 = vpop.f32.mrf.mxu0
  %131 = vmatprep.mubr.f32.mxu0 0.0
  %v132 = vand.u32 %v47, 4294901760
  %v133 = vsub.f32 %v47, %v132
  %v134 = vand.u32 %v133, 4294901760
  %v135 = vsub.f32 %v133, %v134
  %v136 = vand.u32 %v135, 4294901760
  %137 = vmatmul.mubr.f32.gmra.mxu0 %v136
  %v138 = vpop.f32.mrf.mxu0
  %v139 = vadd.f32 0.0, %v138
  %v140 = vpop.f32.mrf.mxu0
  %141 = vdwg.mxu0
  %142 = vmatprep.subr.mxu0 0.0
  %143 = vmatpush1.msra.mxu0 0.0
  %144 = vmatprep.subr.mxu0 0.0
  %145 = vmatpush1.msra.mxu0 0.0
  %146 = vmatprep.subr.mxu0 0.0
  %147 = vmatpush1.msra.mxu0 0.0
  %148 = vmatprep.subr.mxu0 0.0
  %149 = vmatpush1.msra.mxu0 0.0
  %150 = vmatprep.subr.mxu0 0.0
  %151 = vmatpush1.msra.mxu0 0.0
  %152 = vmatprep.subr.mxu0 0.0
  %153 = vmatpush1.msra.mxu0 0.0
  %154 = vmatprep.subr.mxu0 0.0
  %155 = vmatpush1.msra.mxu0 0.0
  %156 = vmatprep.subr.mxu0 0.0
  %157 = vmatpush1.msra.mxu0 0.0
  %158 = vmatprep.subr.mxu0 0.0
  %v159 = vand.u32 %v41, 4294901760
  %v160 = vsub.f32 %v41, %v159
  %v161 = vand.u32 %v160, 4294901760
  %v162 = vsub.f32 %v160, %v161
  %v163 = vand.u32 %v162, 4294901760
  %164 = vmatpush1.msra.mxu0 %v163
  %165 = vmatprep.subr.mxu0 0.0
  %v166 = vand.u32 %v40, 4294901760
  %v167 = vsub.f32 %v40, %v166
  %v168 = vand.u32 %v167, 4294901760
  %v169 = vsub.f32 %v167, %v168
  %v170 = vand.u32 %v169, 4294901760
  %171 = vmatpush1.msra.mxu0 %v170
  %172 = vmatprep.subr.mxu0 0.0
  %v173 = vand.u32 %v39, 4294901760
  %v174 = vsub.f32 %v39, %v173
  %v175 = vand.u32 %v174, 4294901760
  %v176 = vsub.f32 %v174, %v175
  %v177 = vand.u32 %v176, 4294901760
  %178 = vmatpush1.msra.mxu0 %v177
  %179 = vmatprep.subr.mxu0 0.0
  %v180 = vand.u32 %v38, 4294901760
  %v181 = vsub.f32 %v38, %v180
  %v182 = vand.u32 %v181, 4294901760
  %v183 = vsub.f32 %v181, %v182
  %v184 = vand.u32 %v183, 4294901760
  %185 = vmatpush1.msra.mxu0 %v184
  %186 = vmatprep.subr.mxu0 0.0
  %v187 = vand.u32 %v37, 4294901760
  %v188 = vsub.f32 %v37, %v187
  %v189 = vand.u32 %v188, 4294901760
  %v190 = vsub.f32 %v188, %v189
  %v191 = vand.u32 %v190, 4294901760
  %192 = vmatpush1.msra.mxu0 %v191
  %193 = vmatprep.subr.mxu0 0.0
  %v194 = vand.u32 %v36, 4294901760
  %v195 = vsub.f32 %v36, %v194
  %v196 = vand.u32 %v195, 4294901760
  %v197 = vsub.f32 %v195, %v196
  %v198 = vand.u32 %v197, 4294901760
  %199 = vmatpush1.msra.mxu0 %v198
  %200 = vmatprep.subr.mxu0 0.0
  %v201 = vand.u32 %v35, 4294901760
  %v202 = vsub.f32 %v35, %v201
  %v203 = vand.u32 %v202, 4294901760
  %v204 = vsub.f32 %v202, %v203
  %v205 = vand.u32 %v204, 4294901760
  %206 = vmatpush1.msra.mxu0 %v205
  %207 = vmatprep.subr.mxu0 0.0
  %v208 = vand.u32 %v34, 4294901760
  %v209 = vsub.f32 %v34, %v208
  %v210 = vand.u32 %v209, 4294901760
  %v211 = vsub.f32 %v209, %v210
  %v212 = vand.u32 %v211, 4294901760
  %213 = vmatpush1.msra.mxu0 %v212
  %214 = vmatprep.subr.mxu0 0.0
  %215 = vmatpush2.msra.mxu0 0.0
  %216 = vmatprep.subr.mxu0 0.0
  %217 = vmatpush2.msra.mxu0 0.0
  %218 = vmatprep.subr.mxu0 0.0
  %219 = vmatpush2.msra.mxu0 0.0
  %220 = vmatprep.subr.mxu0 0.0
  %221 = vmatpush2.msra.mxu0 0.0
  %222 = vmatprep.subr.mxu0 0.0
  %223 = vmatpush2.msra.mxu0 0.0
  %224 = vmatprep.subr.mxu0 0.0
  %225 = vmatpush2.msra.mxu0 0.0
  %226 = vmatprep.subr.mxu0 0.0
  %227 = vmatpush2.msra.mxu0 0.0
  %228 = vmatprep.subr.mxu0 0.0
  %229 = vmatpush2.msra.mxu0 0.0
  %230 = vmatprep.subr.mxu0 0.0
  %231 = vmatpush2.msra.mxu0 0.0
  %232 = vmatprep.subr.mxu0 0.0
  %233 = vmatpush2.msra.mxu0 0.0
  %234 = vmatprep.subr.mxu0 0.0
  %235 = vmatpush2.msra.mxu0 0.0
  %236 = vmatprep.subr.mxu0 0.0
  %237 = vmatpush2.msra.mxu0 0.0
  %238 = vmatprep.subr.mxu0 0.0
  %239 = vmatpush2.msra.mxu0 0.0
  %240 = vmatprep.subr.mxu0 0.0
  %241 = vmatpush2.msra.mxu0 0.0
  %242 = vmatprep.subr.mxu0 0.0
  %243 = vmatpush2.msra.mxu0 0.0
  %244 = vmatprep.subr.mxu0 0.0
  %245 = vmatpush2.msra.mxu0 0.0
  %246 = vmatprep.mubr.f32.mxu0 0.0
  %v247 = vand.u32 %v44, 4294901760
  %248 = vmatmul.mubr.f32.gmra.mxu0 %v247
  %v249 = vpop.f32.mrf.mxu0
  %v250 = vadd.f32 %v129, %v249
  %v251 = vpop.f32.mrf.mxu0
  %252 = vmatprep.mubr.f32.mxu0 0.0
  %v253 = vand.u32 %v47, 4294901760
  %254 = vmatmul.mubr.f32.gmra.mxu0 %v253
  %v255 = vpop.f32.mrf.mxu0
  %v256 = vadd.f32 %v139, %v255
  %v257 = vpop.f32.mrf.mxu0
  %258 = vdwg.mxu0
  %259 = vmatprep.subr.mxu0 0.0
  %260 = vmatpush1.msra.mxu0 0.0
  %261 = vmatprep.subr.mxu0 0.0
  %262 = vmatpush1.msra.mxu0 0.0
  %263 = vmatprep.subr.mxu0 0.0
  %264 = vmatpush1.msra.mxu0 0.0
  %265 = vmatprep.subr.mxu0 0.0
  %266 = vmatpush1.msra.mxu0 0.0
  %267 = vmatprep.subr.mxu0 0.0
  %268 = vmatpush1.msra.mxu0 0.0
  %269 = vmatprep.subr.mxu0 0.0
  %270 = vmatpush1.msra.mxu0 0.0
  %271 = vmatprep.subr.mxu0 0.0
  %272 = vmatpush1.msra.mxu0 0.0
  %273 = vmatprep.subr.mxu0 0.0
  %274 = vmatpush1.msra.mxu0 0.0
  %275 = vmatprep.subr.mxu0 0.0
  %v276 = vand.u32 %v41, 4294901760
  %v277 = vsub.f32 %v41, %v276
  %278 = vmatpush1.msra.mxu0 %v277
  %279 = vmatprep.subr.mxu0 0.0
  %v280 = vand.u32 %v40, 4294901760
  %v281 = vsub.f32 %v40, %v280
  %282 = vmatpush1.msra.mxu0 %v281
  %283 = vmatprep.subr.mxu0 0.0
  %v284 = vand.u32 %v39, 4294901760
  %v285 = vsub.f32 %v39, %v284
  %286 = vmatpush1.msra.mxu0 %v285
  %287 = vmatprep.subr.mxu0 0.0
  %v288 = vand.u32 %v38, 4294901760
  %v289 = vsub.f32 %v38, %v288
  %290 = vmatpush1.msra.mxu0 %v289
  %291 = vmatprep.subr.mxu0 0.0
  %v292 = vand.u32 %v37, 4294901760
  %v293 = vsub.f32 %v37, %v292
  %294 = vmatpush1.msra.mxu0 %v293
  %295 = vmatprep.subr.mxu0 0.0
  %v296 = vand.u32 %v36, 4294901760
  %v297 = vsub.f32 %v36, %v296
  %298 = vmatpush1.msra.mxu0 %v297
  %299 = vmatprep.subr.mxu0 0.0
  %v300 = vand.u32 %v35, 4294901760
  %v301 = vsub.f32 %v35, %v300
  %302 = vmatpush1.msra.mxu0 %v301
  %303 = vmatprep.subr.mxu0 0.0
  %v304 = vand.u32 %v34, 4294901760
  %v305 = vsub.f32 %v34, %v304
  %306 = vmatpush1.msra.mxu0 %v305
  %307 = vmatprep.subr.mxu0 0.0
  %308 = vmatpush2.msra.mxu0 0.0
  %309 = vmatprep.subr.mxu0 0.0
  %310 = vmatpush2.msra.mxu0 0.0
  %311 = vmatprep.subr.mxu0 0.0
  %312 = vmatpush2.msra.mxu0 0.0
  %313 = vmatprep.subr.mxu0 0.0
  %314 = vmatpush2.msra.mxu0 0.0
  %315 = vmatprep.subr.mxu0 0.0
  %316 = vmatpush2.msra.mxu0 0.0
  %317 = vmatprep.subr.mxu0 0.0
  %318 = vmatpush2.msra.mxu0 0.0
  %319 = vmatprep.subr.mxu0 0.0
  %320 = vmatpush2.msra.mxu0 0.0
  %321 = vmatprep.subr.mxu0 0.0
  %322 = vmatpush2.msra.mxu0 0.0
  %323 = vmatprep.subr.mxu0 0.0
  %324 = vmatpush2.msra.mxu0 0.0
  %325 = vmatprep.subr.mxu0 0.0
  %326 = vmatpush2.msra.mxu0 0.0
  %327 = vmatprep.subr.mxu0 0.0
  %328 = vmatpush2.msra.mxu0 0.0
  %329 = vmatprep.subr.mxu0 0.0
  %330 = vmatpush2.msra.mxu0 0.0
  %331 = vmatprep.subr.mxu0 0.0
  %332 = vmatpush2.msra.mxu0 0.0
  %333 = vmatprep.subr.mxu0 0.0
  %334 = vmatpush2.msra.mxu0 0.0
  %335 = vmatprep.subr.mxu0 0.0
  %336 = vmatpush2.msra.mxu0 0.0
  %337 = vmatprep.subr.mxu0 0.0
  %338 = vmatpush2.msra.mxu0 0.0
  %339 = vmatprep.mubr.f32.mxu0 0.0
  %v340 = vand.u32 %v44, 4294901760
  %v341 = vsub.f32 %v44, %v340
  %342 = vmatmul.mubr.f32.gmra.mxu0 %v341
  %v343 = vpop.f32.mrf.mxu0
  %v344 = vadd.f32 %v250, %v343
  %v345 = vpop.f32.mrf.mxu0
  %346 = vmatprep.mubr.f32.mxu0 0.0
  %v347 = vand.u32 %v47, 4294901760
  %v348 = vsub.f32 %v47, %v347
  %349 = vmatmul.mubr.f32.gmra.mxu0 %v348
  %v350 = vpop.f32.mrf.mxu0
  %v351 = vadd.f32 %v256, %v350
  %v352 = vpop.f32.mrf.mxu0
  %353 = vdwg.mxu0
  %354 = vmatprep.subr.mxu0 0.0
  %355 = vmatpush1.msra.mxu0 0.0
  %356 = vmatprep.subr.mxu0 0.0
  %357 = vmatpush1.msra.mxu0 0.0
  %358 = vmatprep.subr.mxu0 0.0
  %359 = vmatpush1.msra.mxu0 0.0
  %360 = vmatprep.subr.mxu0 0.0
  %361 = vmatpush1.msra.mxu0 0.0
  %362 = vmatprep.subr.mxu0 0.0
  %363 = vmatpush1.msra.mxu0 0.0
  %364 = vmatprep.subr.mxu0 0.0
  %365 = vmatpush1.msra.mxu0 0.0
  %366 = vmatprep.subr.mxu0 0.0
  %367 = vmatpush1.msra.mxu0 0.0
  %368 = vmatprep.subr.mxu0 0.0
  %369 = vmatpush1.msra.mxu0 0.0
  %370 = vmatprep.subr.mxu0 0.0
  %v371 = vand.u32 %v41, 4294901760
  %372 = vmatpush1.msra.mxu0 %v371
  %373 = vmatprep.subr.mxu0 0.0
  %v374 = vand.u32 %v40, 4294901760
  %375 = vmatpush1.msra.mxu0 %v374
  %376 = vmatprep.subr.mxu0 0.0
  %v377 = vand.u32 %v39, 4294901760
  %378 = vmatpush1.msra.mxu0 %v377
  %379 = vmatprep.subr.mxu0 0.0
  %v380 = vand.u32 %v38, 4294901760
  %381 = vmatpush1.msra.mxu0 %v380
  %382 = vmatprep.subr.mxu0 0.0
  %v383 = vand.u32 %v37, 4294901760
  %384 = vmatpush1.msra.mxu0 %v383
  %385 = vmatprep.subr.mxu0 0.0
  %v386 = vand.u32 %v36, 4294901760
  %387 = vmatpush1.msra.mxu0 %v386
  %388 = vmatprep.subr.mxu0 0.0
  %v389 = vand.u32 %v35, 4294901760
  %390 = vmatpush1.msra.mxu0 %v389
  %391 = vmatprep.subr.mxu0 0.0
  %v392 = vand.u32 %v34, 4294901760
  %393 = vmatpush1.msra.mxu0 %v392
  %394 = vmatprep.subr.mxu0 0.0
  %395 = vmatpush2.msra.mxu0 0.0
  %396 = vmatprep.subr.mxu0 0.0
  %397 = vmatpush2.msra.mxu0 0.0
  %398 = vmatprep.subr.mxu0 0.0
  %399 = vmatpush2.msra.mxu0 0.0
  %400 = vmatprep.subr.mxu0 0.0
  %401 = vmatpush2.msra.mxu0 0.0
  %402 = vmatprep.subr.mxu0 0.0
  %403 = vmatpush2.msra.mxu0 0.0
  %404 = vmatprep.subr.mxu0 0.0
  %405 = vmatpush2.msra.mxu0 0.0
  %406 = vmatprep.subr.mxu0 0.0
  %407 = vmatpush2.msra.mxu0 0.0
  %408 = vmatprep.subr.mxu0 0.0
  %409 = vmatpush2.msra.mxu0 0.0
  %410 = vmatprep.subr.mxu0 0.0
  %411 = vmatpush2.msra.mxu0 0.0
  %412 = vmatprep.subr.mxu0 0.0
  %413 = vmatpush2.msra.mxu0 0.0
  %414 = vmatprep.subr.mxu0 0.0
  %415 = vmatpush2.msra.mxu0 0.0
  %416 = vmatprep.subr.mxu0 0.0
  %417 = vmatpush2.msra.mxu0 0.0
  %418 = vmatprep.subr.mxu0 0.0
  %419 = vmatpush2.msra.mxu0 0.0
  %420 = vmatprep.subr.mxu0 0.0
  %421 = vmatpush2.msra.mxu0 0.0
  %422 = vmatprep.subr.mxu0 0.0
  %423 = vmatpush2.msra.mxu0 0.0
  %424 = vmatprep.subr.mxu0 0.0
  %425 = vmatpush2.msra.mxu0 0.0
  %426 = vmatprep.mubr.f32.mxu0 0.0
  %v427 = vand.u32 %v44, 4294901760
  %v428 = vsub.f32 %v44, %v427
  %v429 = vand.u32 %v428, 4294901760
  %430 = vmatmul.mubr.f32.gmra.mxu0 %v429
  %v431 = vpop.f32.mrf.mxu0
  %v432 = vadd.f32 %v344, %v431
  %v433 = vpop.f32.mrf.mxu0
  %434 = vmatprep.mubr.f32.mxu0 0.0
  %v435 = vand.u32 %v47, 4294901760
  %v436 = vsub.f32 %v47, %v435
  %v437 = vand.u32 %v436, 4294901760
  %438 = vmatmul.mubr.f32.gmra.mxu0 %v437
  %v439 = vpop.f32.mrf.mxu0
  %v440 = vadd.f32 %v351, %v439
  %v441 = vpop.f32.mrf.mxu0
  %442 = vdwg.mxu0
  %443 = vmatprep.subr.mxu0 0.0
  %444 = vmatpush1.msra.mxu0 0.0
  %445 = vmatprep.subr.mxu0 0.0
  %446 = vmatpush1.msra.mxu0 0.0
  %447 = vmatprep.subr.mxu0 0.0
  %448 = vmatpush1.msra.mxu0 0.0
  %449 = vmatprep.subr.mxu0 0.0
  %450 = vmatpush1.msra.mxu0 0.0
  %451 = vmatprep.subr.mxu0 0.0
  %452 = vmatpush1.msra.mxu0 0.0
  %453 = vmatprep.subr.mxu0 0.0
  %454 = vmatpush1.msra.mxu0 0.0
  %455 = vmatprep.subr.mxu0 0.0
  %456 = vmatpush1.msra.mxu0 0.0
  %457 = vmatprep.subr.mxu0 0.0
  %458 = vmatpush1.msra.mxu0 0.0
  %459 = vmatprep.subr.mxu0 0.0
  %v460 = vand.u32 %v41, 4294901760
  %v461 = vsub.f32 %v41, %v460
  %v462 = vand.u32 %v461, 4294901760
  %463 = vmatpush1.msra.mxu0 %v462
  %464 = vmatprep.subr.mxu0 0.0
  %v465 = vand.u32 %v40, 4294901760
  %v466 = vsub.f32 %v40, %v465
  %v467 = vand.u32 %v466, 4294901760
  %468 = vmatpush1.msra.mxu0 %v467
  %469 = vmatprep.subr.mxu0 0.0
  %v470 = vand.u32 %v39, 4294901760
  %v471 = vsub.f32 %v39, %v470
  %v472 = vand.u32 %v471, 4294901760
  %473 = vmatpush1.msra.mxu0 %v472
  %474 = vmatprep.subr.mxu0 0.0
  %v475 = vand.u32 %v38, 4294901760
  %v476 = vsub.f32 %v38, %v475
  %v477 = vand.u32 %v476, 4294901760
  %478 = vmatpush1.msra.mxu0 %v477
  %479 = vmatprep.subr.mxu0 0.0
  %v480 = vand.u32 %v37, 4294901760
  %v481 = vsub.f32 %v37, %v480
  %v482 = vand.u32 %v481, 4294901760
  %483 = vmatpush1.msra.mxu0 %v482
  %484 = vmatprep.subr.mxu0 0.0
  %v485 = vand.u32 %v36, 4294901760
  %v486 = vsub.f32 %v36, %v485
  %v487 = vand.u32 %v486, 4294901760
  %488 = vmatpush1.msra.mxu0 %v487
  %489 = vmatprep.subr.mxu0 0.0
  %v490 = vand.u32 %v35, 4294901760
  %v491 = vsub.f32 %v35, %v490
  %v492 = vand.u32 %v491, 4294901760
  %493 = vmatpush1.msra.mxu0 %v492
  %494 = vmatprep.subr.mxu0 0.0
  %v495 = vand.u32 %v34, 4294901760
  %v496 = vsub.f32 %v34, %v495
  %v497 = vand.u32 %v496, 4294901760
  %498 = vmatpush1.msra.mxu0 %v497
  %499 = vmatprep.subr.mxu0 0.0
  %500 = vmatpush2.msra.mxu0 0.0
  %501 = vmatprep.subr.mxu0 0.0
  %502 = vmatpush2.msra.mxu0 0.0
  %503 = vmatprep.subr.mxu0 0.0
  %504 = vmatpush2.msra.mxu0 0.0
  %505 = vmatprep.subr.mxu0 0.0
  %506 = vmatpush2.msra.mxu0 0.0
  %507 = vmatprep.subr.mxu0 0.0
  %508 = vmatpush2.msra.mxu0 0.0
  %509 = vmatprep.subr.mxu0 0.0
  %510 = vmatpush2.msra.mxu0 0.0
  %511 = vmatprep.subr.mxu0 0.0
  %512 = vmatpush2.msra.mxu0 0.0
  %513 = vmatprep.subr.mxu0 0.0
  %514 = vmatpush2.msra.mxu0 0.0
  %515 = vmatprep.subr.mxu0 0.0
  %516 = vmatpush2.msra.mxu0 0.0
  %517 = vmatprep.subr.mxu0 0.0
  %518 = vmatpush2.msra.mxu0 0.0
  %519 = vmatprep.subr.mxu0 0.0
  %520 = vmatpush2.msra.mxu0 0.0
  %521 = vmatprep.subr.mxu0 0.0
  %522 = vmatpush2.msra.mxu0 0.0
  %523 = vmatprep.subr.mxu0 0.0
  %524 = vmatpush2.msra.mxu0 0.0
  %525 = vmatprep.subr.mxu0 0.0
  %526 = vmatpush2.msra.mxu0 0.0
  %527 = vmatprep.subr.mxu0 0.0
  %528 = vmatpush2.msra.mxu0 0.0
  %529 = vmatprep.subr.mxu0 0.0
  %530 = vmatpush2.msra.mxu0 0.0
  %531 = vmatprep.mubr.f32.mxu0 0.0
  %v532 = vand.u32 %v44, 4294901760
  %533 = vmatmul.mubr.f32.gmra.mxu0 %v532
  %v534 = vpop.f32.mrf.mxu0
  %v535 = vadd.f32 %v432, %v534
  %v536 = vpop.f32.mrf.mxu0
  %537 = vmatprep.mubr.f32.mxu0 0.0
  %v538 = vand.u32 %v47, 4294901760
  %539 = vmatmul.mubr.f32.gmra.mxu0 %v538
  %v540 = vpop.f32.mrf.mxu0
  %v541 = vadd.f32 %v440, %v540
  %v542 = vpop.f32.mrf.mxu0
  %543 = vdwg.mxu0
  %544 = vmatprep.subr.mxu0 0.0
  %545 = vmatpush1.msra.mxu0 0.0
  %546 = vmatprep.subr.mxu0 0.0
  %547 = vmatpush1.msra.mxu0 0.0
  %548 = vmatprep.subr.mxu0 0.0
  %549 = vmatpush1.msra.mxu0 0.0
  %550 = vmatprep.subr.mxu0 0.0
  %551 = vmatpush1.msra.mxu0 0.0
  %552 = vmatprep.subr.mxu0 0.0
  %553 = vmatpush1.msra.mxu0 0.0
  %554 = vmatprep.subr.mxu0 0.0
  %555 = vmatpush1.msra.mxu0 0.0
  %556 = vmatprep.subr.mxu0 0.0
  %557 = vmatpush1.msra.mxu0 0.0
  %558 = vmatprep.subr.mxu0 0.0
  %559 = vmatpush1.msra.mxu0 0.0
  %560 = vmatprep.subr.mxu0 0.0
  %v561 = vand.u32 %v41, 4294901760
  %562 = vmatpush1.msra.mxu0 %v561
  %563 = vmatprep.subr.mxu0 0.0
  %v564 = vand.u32 %v40, 4294901760
  %565 = vmatpush1.msra.mxu0 %v564
  %566 = vmatprep.subr.mxu0 0.0
  %v567 = vand.u32 %v39, 4294901760
  %568 = vmatpush1.msra.mxu0 %v567
  %569 = vmatprep.subr.mxu0 0.0
  %v570 = vand.u32 %v38, 4294901760
  %571 = vmatpush1.msra.mxu0 %v570
  %572 = vmatprep.subr.mxu0 0.0
  %v573 = vand.u32 %v37, 4294901760
  %574 = vmatpush1.msra.mxu0 %v573
  %575 = vmatprep.subr.mxu0 0.0
  %v576 = vand.u32 %v36, 4294901760
  %577 = vmatpush1.msra.mxu0 %v576
  %578 = vmatprep.subr.mxu0 0.0
  %v579 = vand.u32 %v35, 4294901760
  %580 = vmatpush1.msra.mxu0 %v579
  %581 = vmatprep.subr.mxu0 0.0
  %v582 = vand.u32 %v34, 4294901760
  %583 = vmatpush1.msra.mxu0 %v582
  %584 = vmatprep.subr.mxu0 0.0
  %585 = vmatpush2.msra.mxu0 0.0
  %586 = vmatprep.subr.mxu0 0.0
  %587 = vmatpush2.msra.mxu0 0.0
  %588 = vmatprep.subr.mxu0 0.0
  %589 = vmatpush2.msra.mxu0 0.0
  %590 = vmatprep.subr.mxu0 0.0
  %591 = vmatpush2.msra.mxu0 0.0
  %592 = vmatprep.subr.mxu0 0.0
  %593 = vmatpush2.msra.mxu0 0.0
  %594 = vmatprep.subr.mxu0 0.0
  %595 = vmatpush2.msra.mxu0 0.0
  %596 = vmatprep.subr.mxu0 0.0
  %597 = vmatpush2.msra.mxu0 0.0
  %598 = vmatprep.subr.mxu0 0.0
  %599 = vmatpush2.msra.mxu0 0.0
  %600 = vmatprep.subr.mxu0 0.0
  %601 = vmatpush2.msra.mxu0 0.0
  %602 = vmatprep.subr.mxu0 0.0
  %603 = vmatpush2.msra.mxu0 0.0
  %604 = vmatprep.subr.mxu0 0.0
  %605 = vmatpush2.msra.mxu0 0.0
  %606 = vmatprep.subr.mxu0 0.0
  %607 = vmatpush2.msra.mxu0 0.0
  %608 = vmatprep.subr.mxu0 0.0
  %609 = vmatpush2.msra.mxu0 0.0
  %610 = vmatprep.subr.mxu0 0.0
  %611 = vmatpush2.msra.mxu0 0.0
  %612 = vmatprep.subr.mxu0 0.0
  %613 = vmatpush2.msra.mxu0 0.0
  %614 = vmatprep.subr.mxu0 0.0
  %615 = vmatpush2.msra.mxu0 0.0
  %616 = vmatprep.mubr.f32.mxu0 0.0
  %v617 = vand.u32 %v44, 4294901760
  %618 = vmatmul.mubr.f32.gmra.mxu0 %v617
  %v619 = vpop.f32.mrf.mxu0
  %v620 = vadd.f32 %v535, %v619
  %v621 = vpop.f32.mrf.mxu0
  %622 = vmatprep.mubr.f32.mxu0 0.0
  %v623 = vand.u32 %v47, 4294901760
  %624 = vmatmul.mubr.f32.gmra.mxu0 %v623
  %v625 = vpop.f32.mrf.mxu0
  %v626 = vadd.f32 %v541, %v625
  %v627 = vpop.f32.mrf.mxu0
  %628 = vdwg.mxu0
  %v629 = vmul.f32 %v14, %v620
  %v630 = vmul.f32 %v15, %v626
  %vm631 = vcmask 261120
  %v632 = vsel %vm631, %v629, 0.0
  %633 = vadd.xlane.f32.xlu0 %v632
  %v634 = vpop.xlane.xlu0 %633
  %v635 = vsel %vm631, %v630, 0.0
  %636 = vadd.xlane.f32.xlu0 %v635
  %v637 = vpop.xlane.xlu0 %636
  %v638 = vmul.f32 %v14, %v14
  %v639 = vmul.f32 %v15, %v15
  %v640 = vsel %vm631, %v638, 0.0
  %641 = vadd.xlane.f32.xlu0 %v640
  %v642 = vpop.xlane.xlu0 %641
  %v643 = vsel %vm631, %v639, 0.0
  %644 = vadd.xlane.f32.xlu0 %v643
  %v645 = vpop.xlane.xlu0 %644
  %v646 = vmul.f32 %v620, %v620
  %v647 = vmul.f32 %v626, %v626
  %v648 = vsel %vm631, %v646, 0.0
  %649 = vadd.xlane.f32.xlu0 %v648
  %v650 = vpop.xlane.xlu0 %649
  %v651 = vsel %vm631, %v647, 0.0
  %652 = vadd.xlane.f32.xlu0 %v651
  %v653 = vpop.xlane.xlu0 %652
  %v654 = vmax.f32 %v642, 1e-16
  %v655 = vmax.f32 %v645, 1e-16
  %v656 = vrsqrt.pop %v654
  %v657 = vrsqrt.pop %v655
  %v658 = vmax.f32 %v650, 1e-16
  %v659 = vmax.f32 %v653, 1e-16
  %v660 = vrsqrt.pop %v658
  %v661 = vrsqrt.pop %v659
  %v662 = vmul.f32 %v656, %v660
  %v663 = vmul.f32 %v657, %v661
  %v664 = vmul.f32 %v634, %v662
  %v665 = vmul.f32 %v637, %v663
  %v666 = vsub.f32 1.0, %v664
  %v667 = vsub.f32 1.0, %v665
  %v668 = vsel %vm18, %v666, 0.0
  %v669 = vsel %vm19, %v667, 0.0
  %vm670 = vcmask 7168
  %671 = vst.msk [vmem:[%s3] sm:$0xff] %vm670, %v668
  %672 = vst.msk [vmem:[%s3 + $0x8] sm:$0xff] %vm670, %v669
  // Predicated region
  $region14: #{cossim_loss_sum_pallas.1} parent=0 // pred_check
    _
  $region15: #{cossim_loss_sum_pallas.1} parent=0 // pred_check_branch
    %674 = sbr.rel (0) target = $region17
  $region16: #{cossim_loss_sum_pallas.1} parent=0 // pred_region
    _
  $region17: #{cossim_loss_sum_pallas.1} parent=0 // pred_fallthru
    _
  // Predicated region
  $region18: #{cossim_loss_sum_pallas.1} parent=0 // pred_check
    _
  $region19: #{cossim_loss_sum_pallas.1} parent=0 // pred_check_branch
    %676 = sbr.rel (0) target = $region21
  $region20: #{cossim_loss_sum_pallas.1} parent=0 // pred_region
    _
  $region21: #{cossim_loss_sum_pallas.1} parent=0 // pred_fallthru
    _

</llo_original>
